<compile_context>
chip_gen: v7x
topology: tpu7x:2x2x1
jax: 0.10.0
libtpu: 0.0.40
codegen_flags: <defaults>
</compile_context>

<pallas_src>
import jax
import jax.numpy as jnp
from jax.experimental import pallas as pl
from jax.experimental.pallas import tpu as pltpu

NEG_SLOPE = 0.01  # PyTorch F.leaky_relu default negative_slope
LANE = 128
SUBLANE = 8


def _round_up(x, m):
    return ((x + m - 1) // m) * m


def _leaky_relu(x):
    return jnp.where(x > 0, x, NEG_SLOPE * x)


def critic_kernel(x_ref, w1_ref, b1_ref, w2_ref, b2_ref, w3_ref, b3_ref, o_ref):
    """One batch tile per grid step; weights stay VMEM-resident (constant index maps)."""
    mm_dtype = w1_ref.dtype  # bf16 on the fast path, f32 on the parity path

    # l1 + leaky_relu: MXU matmul with f32 accumulation, bias/activation in f32.
    x = x_ref[...].astype(mm_dtype)
    h1 = _leaky_relu(
        jnp.dot(x, w1_ref[...], preferred_element_type=jnp.float32) + b1_ref[...]
    )

    # l2 + leaky_relu: clean (Hp x Hp) = 128x128 MXU tile thanks to hidden padding.
    h2 = _leaky_relu(
        jnp.dot(h1.astype(mm_dtype), w2_ref[...], preferred_element_type=jnp.float32)
        + b2_ref[...]
    )

    # l3 off the MXU: elementwise multiply (VPU) + cross-lane reduce (XLU) + SMEM bias.
    q = jnp.sum(h2 * w3_ref[...], axis=-1, keepdims=True) + b3_ref[0, 0]
    o_ref[...] = q.astype(o_ref.dtype)


def prepare_critic_params(params, *, matmul_dtype=jnp.bfloat16):
    """One-time prep: pad hidden dim to 128 lanes, lay w3 out as a (1,Hp) row,
    cast matmul weights to `matmul_dtype`.  Zero padding is an exact no-op for
    the math (padded h1/h2 columns are leaky_relu(0)=0 and meet zero weights)."""
    w1, b1 = params["w1"], params["b1"]
    w2, b2 = params["w2"], params["b2"]
    w3, b3 = params["w3"], params["b3"]

    H = w1.shape[1]
    Hp = _round_up(H, LANE)
    pad = Hp - H
    if pad:
        w1 = jnp.pad(w1, ((0, 0), (0, pad)))
        b1 = jnp.pad(b1, ((0, 0), (0, pad)))
        w2 = jnp.pad(w2, ((0, pad), (0, pad)))
        b2 = jnp.pad(b2, ((0, 0), (0, pad)))
        w3 = jnp.pad(w3, ((0, pad), (0, 0)))

    return {
        "w1": w1.astype(matmul_dtype),
        "b1": b1.astype(jnp.float32),
        "w2": w2.astype(matmul_dtype),
        "b2": b2.astype(jnp.float32),
        "w3_row": w3.T.astype(jnp.float32),  # (1, Hp) lane-dense row for the VPU l3
        "b3": b3.astype(jnp.float32),        # (1, 1) scalar -> SMEM
    }


def critic_forward(state, prepped, *, tile_b=8192):
    """state: (B, state_dim) f32.  prepped: output of prepare_critic_params."""
    w1, b1 = prepped["w1"], prepped["b1"]
    w2, b2 = prepped["w2"], prepped["b2"]
    w3r, b3 = prepped["w3_row"], prepped["b3"]

    B, S = state.shape
    Hp = w1.shape[1]

    # Batch tile: multiple of 8 (sublane), capped at tile_b, and additionally
    # capped at ~B/2 so mid-size batches produce >= 2 grid tiles (keeps both
    # TensorCores busy on v7x; harmless on single-TC v5e/v6e).
    TILE_B = max(SUBLANE,
                 min(_round_up(tile_b, SUBLANE),
                     _round_up(pl.cdiv(B, 2), SUBLANE)))
    num_tiles = pl.cdiv(B, TILE_B)

    out = pl.pallas_call(
        critic_kernel,
        out_shape=jax.ShapeDtypeStruct((B, 1), jnp.float32),
        grid=(num_tiles,),
        in_specs=[
            # state: tiled along batch; ragged last tile handled by Pallas
            # (OOB input rows are don't-care, OOB output writes are masked).
            pl.BlockSpec((TILE_B, S), lambda i: (i, 0)),
            # weights/biases: constant block index -> VMEM-resident, no re-DMA.
            pl.BlockSpec((S, Hp), lambda i: (0, 0)),
            pl.BlockSpec((1, Hp), lambda i: (0, 0)),
            pl.BlockSpec((Hp, Hp), lambda i: (0, 0)),
            pl.BlockSpec((1, Hp), lambda i: (0, 0)),
            pl.BlockSpec((1, Hp), lambda i: (0, 0)),
            # b3: tiny scalar, keep it in SMEM.
            pl.BlockSpec(memory_space=pltpu.MemorySpace.SMEM),
        ],
        out_specs=pl.BlockSpec((TILE_B, 1), lambda i: (i, 0)),
        compiler_params=pltpu.CompilerParams(
            dimension_semantics=("parallel",),  # shard batch grid across TCs on v7x
        ),
    )(state, w1, b1, w2, b2, w3r, b3)

    return out


def init_critic_params(key, state_dim, hidden=100):
    """Deterministic init mirroring nn.Linear (weights stored (in_dim, out_dim))."""
    ks = jax.random.split(key, 6)

    def lin(kw, kb, in_dim, out_dim):
        bound = 1.0 / (in_dim ** 0.5)
        w = jax.random.uniform(kw, (in_dim, out_dim), jnp.float32, -bound, bound)
        b = jax.random.uniform(kb, (1, out_dim), jnp.float32, -bound, bound)
        return w, b

    w1, b1 = lin(ks[0], ks[1], state_dim, hidden)
    w2, b2 = lin(ks[2], ks[3], hidden, hidden)
    w3, b3 = lin(ks[4], ks[5], hidden, 1)
    return {"w1": w1, "b1": b1, "w2": w2, "b2": b2, "w3": w3, "b3": b3}


def critic_forward_ref(state, params):
    """Pure-JAX f32 reference for correctness checks (unpadded params)."""
    h1 = jax.nn.leaky_relu(state @ params["w1"] + params["b1"], NEG_SLOPE)
    h2 = jax.nn.leaky_relu(h1 @ params["w2"] + params["b2"], NEG_SLOPE)
    return h2 @ params["w3"] + params["b3"]


if __name__ == "__main__":
    key = jax.random.PRNGKey(0)
    k_param, k_state = jax.random.split(key)

    # Small shapes; hidden=100 (module default) exercises the 100->128 padding,
    # B=10 exercises the ragged last batch tile (TILE_B=8 -> 2 grid tiles).
    B, STATE_DIM, HIDDEN = 10, 16, 100
    params = init_critic_params(k_param, STATE_DIM, hidden=HIDDEN)
    state = jax.random.normal(k_state, (B, STATE_DIM), jnp.float32)

    q_ref = critic_forward_ref(state, params)

    # f32 parity path: exact match to the reference.
    prepped_f32 = prepare_critic_params(params, matmul_dtype=jnp.float32)
    q_f32 = jax.block_until_ready(critic_forward(state, prepped_f32))
    assert q_f32.shape == (B, 1), q_f32.shape
    assert jnp.allclose(q_f32, q_ref, atol=1e-5, rtol=1e-5), (q_f32, q_ref)

    # Default fast path: bf16 matmul operands, f32 accumulation (loose tolerance).
    prepped = prepare_critic_params(params)  # bf16 weights
    q = jax.block_until_ready(critic_forward(state, prepped))
    assert q.shape == (B, 1), q.shape
    assert jnp.allclose(q, q_ref, atol=3e-2, rtol=3e-2), (q, q_ref)

    print("KERNEL_OK")
</pallas_src>

<mosaic_0001>
module attributes {stable_mosaic.version = 11 : i64} {
  func.func @critic_kernel(%arg0: i32, %arg1: memref<8x16xf32, #tpu.memory_space<vmem>>, %arg2: memref<16x128xf32, #tpu.memory_space<vmem>>, %arg3: memref<1x128xf32, #tpu.memory_space<vmem>>, %arg4: memref<128x128xf32, #tpu.memory_space<vmem>>, %arg5: memref<1x128xf32, #tpu.memory_space<vmem>>, %arg6: memref<1x128xf32, #tpu.memory_space<vmem>>, %arg7: memref<1x1xf32, #tpu.memory_space<smem>>, %arg8: memref<8x1xf32, #tpu.memory_space<vmem>>) attributes {dimension_semantics = [#tpu.dimension_semantics<parallel>], iteration_bounds = array<i64: 2>, scalar_prefetch = 0 : i64, scratch_operands = 0 : i64, tpu.core_type = #tpu.core_type<tc>, window_params = [{transform_indices = @transform_0, window_bounds = array<i64: 8, 16>}, {pipeline_mode = #tpu.pipeline_mode<synchronous>, transform_indices = @transform_1, window_bounds = array<i64: 16, 128>}, {pipeline_mode = #tpu.pipeline_mode<synchronous>, transform_indices = @transform_2, window_bounds = array<i64: 1, 128>}, {pipeline_mode = #tpu.pipeline_mode<synchronous>, transform_indices = @transform_3, window_bounds = array<i64: 128, 128>}, {pipeline_mode = #tpu.pipeline_mode<synchronous>, transform_indices = @transform_4, window_bounds = array<i64: 1, 128>}, {pipeline_mode = #tpu.pipeline_mode<synchronous>, transform_indices = @transform_5, window_bounds = array<i64: 1, 128>}, {transform_indices = @transform_6, window_bounds = array<i64: 1, 1>}, {transform_indices = @transform_7, window_bounds = array<i64: 8, 1>}]} {
    %c0 = arith.constant 0 : index
    %c0_0 = arith.constant 0 : index
    %0 = vector.load %arg1[%c0, %c0_0] : memref<8x16xf32, #tpu.memory_space<vmem>>, vector<8x16xf32>
    %c0_1 = arith.constant 0 : index
    %c0_2 = arith.constant 0 : index
    %1 = vector.load %arg2[%c0_1, %c0_2] : memref<16x128xf32, #tpu.memory_space<vmem>>, vector<16x128xf32>
    %cst = arith.constant dense<0.000000e+00> : vector<8x128xf32>
    %2 = tpu.matmul %0, %1, %cst {dimension_numbers = #tpu.dot_dimension_numbers<[1], [0], [0], [1], [0, 0, 1, 1], [], []>} : vector<8x16xf32>, vector<16x128xf32>, vector<8x128xf32> -> vector<8x128xf32>
    %c0_3 = arith.constant 0 : index
    %c0_4 = arith.constant 0 : index
    %3 = vector.load %arg3[%c0_3, %c0_4] : memref<1x128xf32, #tpu.memory_space<vmem>>, vector<1x128xf32>
    %4 = vector.broadcast %3 : vector<1x128xf32> to vector<8x128xf32>
    %5 = arith.addf %2, %4 : vector<8x128xf32>
    %cst_5 = arith.constant 0.000000e+00 : f32
    %6 = vector.broadcast %cst_5 : f32 to vector<8x128xf32>
    %7 = arith.cmpf ogt, %5, %6 : vector<8x128xf32>
    %cst_6 = arith.constant 0.00999999977 : f32
    %8 = vector.broadcast %cst_6 : f32 to vector<8x128xf32>
    %9 = arith.mulf %8, %5 : vector<8x128xf32>
    %10 = arith.select %7, %5, %9 : vector<8x128xi1>, vector<8x128xf32>
    %c0_7 = arith.constant 0 : index
    %c0_8 = arith.constant 0 : index
    %11 = vector.load %arg4[%c0_7, %c0_8] : memref<128x128xf32, #tpu.memory_space<vmem>>, vector<128x128xf32>
    %cst_9 = arith.constant dense<0.000000e+00> : vector<8x128xf32>
    %12 = tpu.matmul %10, %11, %cst_9 {dimension_numbers = #tpu.dot_dimension_numbers<[1], [0], [0], [1], [0, 0, 1, 1], [], []>} : vector<8x128xf32>, vector<128x128xf32>, vector<8x128xf32> -> vector<8x128xf32>
    %c0_10 = arith.constant 0 : index
    %c0_11 = arith.constant 0 : index
    %13 = vector.load %arg5[%c0_10, %c0_11] : memref<1x128xf32, #tpu.memory_space<vmem>>, vector<1x128xf32>
    %14 = vector.broadcast %13 : vector<1x128xf32> to vector<8x128xf32>
    %15 = arith.addf %12, %14 : vector<8x128xf32>
    %cst_12 = arith.constant 0.000000e+00 : f32
    %16 = vector.broadcast %cst_12 : f32 to vector<8x128xf32>
    %17 = arith.cmpf ogt, %15, %16 : vector<8x128xf32>
    %cst_13 = arith.constant 0.00999999977 : f32
    %18 = vector.broadcast %cst_13 : f32 to vector<8x128xf32>
    %19 = arith.mulf %18, %15 : vector<8x128xf32>
    %20 = arith.select %17, %15, %19 : vector<8x128xi1>, vector<8x128xf32>
    %c0_14 = arith.constant 0 : index
    %c0_15 = arith.constant 0 : index
    %21 = vector.load %arg6[%c0_14, %c0_15] : memref<1x128xf32, #tpu.memory_space<vmem>>, vector<1x128xf32>
    %22 = vector.broadcast %21 : vector<1x128xf32> to vector<8x128xf32>
    %23 = arith.mulf %20, %22 : vector<8x128xf32>
    %cst_16 = arith.constant dense<0.000000e+00> : vector<8xf32>
    %24 = vector.multi_reduction <add>, %23, %cst_16 [1] : vector<8x128xf32> to vector<8xf32>
    %25 = vector.shape_cast %24 : vector<8xf32> to vector<8x1xf32>
    %c0_17 = arith.constant 0 : index
    %c0_18 = arith.constant 0 : index
    %26 = memref.load %arg7[%c0_17, %c0_18] : memref<1x1xf32, #tpu.memory_space<smem>>
    %27 = vector.broadcast %26 : f32 to vector<8x1xf32>
    %28 = arith.addf %25, %27 : vector<8x1xf32>
    %c0_19 = arith.constant 0 : index
    %c0_20 = arith.constant 0 : index
    %29 = vector.load %arg8[%c0_19, %c0_20] : memref<8x1xf32, #tpu.memory_space<vmem>>, vector<8x1xf32>
    tpu.vector_store %arg8[%c0_19, %c0_20], %28 {strides = array<i32>} : memref<8x1xf32, #tpu.memory_space<vmem>>, vector<8x1xf32>,
    return
  }
  func.func @transform_0(%arg0: i32) -> (i32, i32) {
    %c0_i32 = arith.constant 0 : i32
    %c0_i32_0 = arith.constant 0 : i32
    return %arg0, %c0_i32 : i32, i32
  }
  func.func @transform_1(%arg0: i32) -> (i32, i32) {
    %c0_i32 = arith.constant 0 : i32
    %c0_i32_0 = arith.constant 0 : i32
    %c0_i32_1 = arith.constant 0 : i32
    return %c0_i32, %c0_i32_0 : i32, i32
  }
  func.func @transform_2(%arg0: i32) -> (i32, i32) {
    %c0_i32 = arith.constant 0 : i32
    %c0_i32_0 = arith.constant 0 : i32
    %c0_i32_1 = arith.constant 0 : i32
    return %c0_i32, %c0_i32_0 : i32, i32
  }
  func.func @transform_3(%arg0: i32) -> (i32, i32) {
    %c0_i32 = arith.constant 0 : i32
    %c0_i32_0 = arith.constant 0 : i32
    %c0_i32_1 = arith.constant 0 : i32
    return %c0_i32, %c0_i32_0 : i32, i32
  }
  func.func @transform_4(%arg0: i32) -> (i32, i32) {
    %c0_i32 = arith.constant 0 : i32
    %c0_i32_0 = arith.constant 0 : i32
    %c0_i32_1 = arith.constant 0 : i32
    return %c0_i32, %c0_i32_0 : i32, i32
  }
  func.func @transform_5(%arg0: i32) -> (i32, i32) {
    %c0_i32 = arith.constant 0 : i32
    %c0_i32_0 = arith.constant 0 : i32
    %c0_i32_1 = arith.constant 0 : i32
    return %c0_i32, %c0_i32_0 : i32, i32
  }
  func.func @transform_6(%arg0: i32) -> (i32, i32) {
    %c0_i32 = arith.constant 0 : i32
    %c0_i32_0 = arith.constant 0 : i32
    %c0_i32_1 = arith.constant 0 : i32
    return %c0_i32, %c0_i32_0 : i32, i32
  }
  func.func @transform_7(%arg0: i32) -> (i32, i32) {
    %c0_i32 = arith.constant 0 : i32
    %c0_i32_0 = arith.constant 0 : i32
    return %arg0, %c0_i32 : i32, i32
  }
}

</mosaic_0001>

<llo_original>
// kernel: tpu_custom_call.1
$region0: #{tpu_custom_call.1}
  #allocation0 [shape = 'u32[]', space=smem, size = 0x4, offset = 0x4, fixed_abs, tag = 'smem constant byte address 0x4 - core index']
  #allocation1 [shape = 'u32[144,128]{1,0:T(1,128)}', space=vmem, size = 0x12000, scoped, tag = 'internal scratch']
  #allocation2 [shape = 'f32[1,1]{1,0:T(1,128)S(6)}', space=smem, size = 0x200, scoped, tag = 'scoped memory for tpu_custom_call.1']
  %s0 = inlined_call_operand.hbm [shape: f32[10,16], index: 0, kind: input, shape index: {}]
  %s1 = inlined_call_operand.hbm [shape: f32[16,128], index: 1, kind: input, shape index: {}]
  %s2 = inlined_call_operand.vmem [shape: f32[1,128], index: 2, kind: input, shape index: {}]
  %s3 = inlined_call_operand.hbm [shape: f32[128,128], index: 3, kind: input, shape index: {}]
  %s4 = inlined_call_operand.vmem [shape: f32[1,128], index: 4, kind: input, shape index: {}]
  %s5 = inlined_call_operand.vmem [shape: f32[1,128], index: 5, kind: input, shape index: {}]
  %s6 = inlined_call_operand.<no memory space> [shape: f32[1,1], index: 6, kind: input, shape index: {}]
  %s7 = inlined_call_operand.vmem [shape: f32[10,1], index: 7, kind: output, shape index: {}]
  %s8 = sld [smem:[#allocation0]]
  $region73: #{tpu_custom_call.1} parent=0
    _
  %s10 = ssub.s32 1, %s8
  %s11 = scalar_select 0, %s10, %s8
  %12 = sst [smem:[#allocation2]] %s6
  $region1: #{tpu_custom_call.1} parent=0
    #allocation3 [shape = 'u8[8192]{0}', space=vmem, size = 0x2000, scoped, tag = 'input window, operand 0']
    #allocation4 [shape = 's32[2]{0}', space=sflag, size = 0x8, scoped, tag = 'scoped memory for tpu_custom_call.1']
    #allocation5 [shape = 'u8[8192]{0}', space=vmem, size = 0x2000, scoped, tag = 'input window, operand 1, single buffered']
    #allocation6 [shape = 's32[1]{0}', space=sflag, size = 0x4, scoped, tag = 'scoped memory for tpu_custom_call.1']
    #allocation7 [shape = 'u8[65536]{0}', space=vmem, size = 0x10000, scoped, tag = 'input window, operand 3, single buffered']
    %13 = vsyncpa [#allocation4], 0
    %s14 = scalar_lea.sflag [#allocation4], 1
    %15 = vsyncpa %s14, 0
    %16 = vsyncpa [#allocation6], 0
    loop: start=0, step=1, limit=4
    $region2: #{tpu_custom_call.1} parent=1 // loop_pre_header
      _
    $region3: #{tpu_custom_call.1} parent=1 // loop_header
      %s18 = sphi 0, %s22
      %p19 = scmp.ge.s32.totalorder %s18, 4
      %s28 = sphi 0, %s30
      %s31 = sphi 0, %s28
      %s32 = sphi 0, %s31
      %s48 = sphi 0, %s32
      %s52 = sphi 0, %s52
      %s54 = sphi 0, %s52
      %s55 = sphi 0, %s54
      %s69 = sphi 0, %s55
      %s73 = sphi 0, %s73
      %s75 = sphi 0, %s73
      %s76 = sphi 0, %s75
      %s90 = sphi 0, %s76
      %s94 = sphi 0, %s94
      %s96 = sphi 0, %s94
      %s97 = sphi 0, %s96
      %s111 = sphi 0, %s97
      %s115 = sphi 0, %s115
      %s117 = sphi 0, %s115
      %s118 = sphi 0, %s117
      %s132 = sphi 0, %s118
      %s136 = sphi 0, %s136
      %s138 = sphi 0, %s136
      %s139 = sphi 0, %s138
      %s153 = sphi 0, %s139
      %s157 = sphi 0, %s157
      %s159 = sphi 0, %s157
      %s160 = sphi 0, %s159
      %s174 = sphi 0, %s160
      %s180 = sphi 0, %s182
      %s183 = sphi 0, %s180
      %s184 = sphi 0, %s183
      %s200 = sphi 0, %s184
    $region4: #{tpu_custom_call.1} parent=1 // loop_header_branch
      %21 = sbr.rel (%p19) target = $region8
    $region5: #{tpu_custom_call.1} parent=1 // loop_body
      %s23 = ssub.s32 %s18, 1
      %s24 = ssub.s32 %s18, 2
      %s25 = sadd.s32 %s18, 1
      %s26 = ssub.s32 %s18, %s25
      %p27 = scmp.eq.s32.totalorder %s26, 0
      %s29 = sadd.s32 %s28, 1
      %s30 = scalar_select %p27, %s28, %s29
      %p33 = pneg %p27
      %p34 = scmp.eq.s32.totalorder %s18, 1
      %p35 = por %p33, %p34
      %p36 = scmp.ne.s32.totalorder %s28, %s31
      %p37 = scmp.eq.s32.totalorder %s18, 0
      %p38 = por %p36, %p37
      %p39 = scmp.ne.s32.totalorder %s28, %s31
      %p40 = scmp.eq.s32.totalorder %s23, 1
      %p41 = por %p39, %p40
      %p42 = scmp.ne.s32.totalorder %s31, %s32
      %p43 = scmp.eq.s32.totalorder %s23, 0
      %p44 = por %p42, %p43
      %p45 = scmp.ne.s32.totalorder %s31, %s32
      %p46 = scmp.eq.s32.totalorder %s24, 1
      %p47 = por %p45, %p46
      %p49 = scmp.ne.s32.totalorder %s32, %s48
      %p50 = scmp.eq.s32.totalorder %s24, 0
      %p51 = por %p49, %p50
      %s53 = sadd.s32 %s52, 1
      %p56 = scmp.eq.s32.totalorder %s18, 1
      %p57 = scmp.ne.s32.totalorder %s52, %s54
      %p58 = scmp.eq.s32.totalorder %s18, 0
      %p59 = por %p57, %p58
      %p60 = scmp.ne.s32.totalorder %s52, %s54
      %p61 = scmp.eq.s32.totalorder %s23, 1
      %p62 = por %p60, %p61
      %p63 = scmp.ne.s32.totalorder %s54, %s55
      %p64 = scmp.eq.s32.totalorder %s23, 0
      %p65 = por %p63, %p64
      %p66 = scmp.ne.s32.totalorder %s54, %s55
      %p67 = scmp.eq.s32.totalorder %s24, 1
      %p68 = por %p66, %p67
      %p70 = scmp.ne.s32.totalorder %s55, %s69
      %p71 = scmp.eq.s32.totalorder %s24, 0
      %p72 = por %p70, %p71
      %s74 = sadd.s32 %s73, 1
      %p77 = scmp.eq.s32.totalorder %s18, 1
      %p78 = scmp.ne.s32.totalorder %s73, %s75
      %p79 = scmp.eq.s32.totalorder %s18, 0
      %p80 = por %p78, %p79
      %p81 = scmp.ne.s32.totalorder %s73, %s75
      %p82 = scmp.eq.s32.totalorder %s23, 1
      %p83 = por %p81, %p82
      %p84 = scmp.ne.s32.totalorder %s75, %s76
      %p85 = scmp.eq.s32.totalorder %s23, 0
      %p86 = por %p84, %p85
      %p87 = scmp.ne.s32.totalorder %s75, %s76
      %p88 = scmp.eq.s32.totalorder %s24, 1
      %p89 = por %p87, %p88
      %p91 = scmp.ne.s32.totalorder %s76, %s90
      %p92 = scmp.eq.s32.totalorder %s24, 0
      %p93 = por %p91, %p92
      %s95 = sadd.s32 %s94, 1
      %p98 = scmp.eq.s32.totalorder %s18, 1
      %p99 = scmp.ne.s32.totalorder %s94, %s96
      %p100 = scmp.eq.s32.totalorder %s18, 0
      %p101 = por %p99, %p100
      %p102 = scmp.ne.s32.totalorder %s94, %s96
      %p103 = scmp.eq.s32.totalorder %s23, 1
      %p104 = por %p102, %p103
      %p105 = scmp.ne.s32.totalorder %s96, %s97
      %p106 = scmp.eq.s32.totalorder %s23, 0
      %p107 = por %p105, %p106
      %p108 = scmp.ne.s32.totalorder %s96, %s97
      %p109 = scmp.eq.s32.totalorder %s24, 1
      %p110 = por %p108, %p109
      %p112 = scmp.ne.s32.totalorder %s97, %s111
      %p113 = scmp.eq.s32.totalorder %s24, 0
      %p114 = por %p112, %p113
      %s116 = sadd.s32 %s115, 1
      %p119 = scmp.eq.s32.totalorder %s18, 1
      %p120 = scmp.ne.s32.totalorder %s115, %s117
      %p121 = scmp.eq.s32.totalorder %s18, 0
      %p122 = por %p120, %p121
      %p123 = scmp.ne.s32.totalorder %s115, %s117
      %p124 = scmp.eq.s32.totalorder %s23, 1
      %p125 = por %p123, %p124
      %p126 = scmp.ne.s32.totalorder %s117, %s118
      %p127 = scmp.eq.s32.totalorder %s23, 0
      %p128 = por %p126, %p127
      %p129 = scmp.ne.s32.totalorder %s117, %s118
      %p130 = scmp.eq.s32.totalorder %s24, 1
      %p131 = por %p129, %p130
      %p133 = scmp.ne.s32.totalorder %s118, %s132
      %p134 = scmp.eq.s32.totalorder %s24, 0
      %p135 = por %p133, %p134
      %s137 = sadd.s32 %s136, 1
      %p140 = scmp.eq.s32.totalorder %s18, 1
      %p141 = scmp.ne.s32.totalorder %s136, %s138
      %p142 = scmp.eq.s32.totalorder %s18, 0
      %p143 = por %p141, %p142
      %p144 = scmp.ne.s32.totalorder %s136, %s138
      %p145 = scmp.eq.s32.totalorder %s23, 1
      %p146 = por %p144, %p145
      %p147 = scmp.ne.s32.totalorder %s138, %s139
      %p148 = scmp.eq.s32.totalorder %s23, 0
      %p149 = por %p147, %p148
      %p150 = scmp.ne.s32.totalorder %s138, %s139
      %p151 = scmp.eq.s32.totalorder %s24, 1
      %p152 = por %p150, %p151
      %p154 = scmp.ne.s32.totalorder %s139, %s153
      %p155 = scmp.eq.s32.totalorder %s24, 0
      %p156 = por %p154, %p155
      %s158 = sadd.s32 %s157, 1
      %p161 = scmp.eq.s32.totalorder %s18, 1
      %p162 = scmp.ne.s32.totalorder %s157, %s159
      %p163 = scmp.eq.s32.totalorder %s18, 0
      %p164 = por %p162, %p163
      %p165 = scmp.ne.s32.totalorder %s157, %s159
      %p166 = scmp.eq.s32.totalorder %s23, 1
      %p167 = por %p165, %p166
      %p168 = scmp.ne.s32.totalorder %s159, %s160
      %p169 = scmp.eq.s32.totalorder %s23, 0
      %p170 = por %p168, %p169
      %p171 = scmp.ne.s32.totalorder %s159, %s160
      %p172 = scmp.eq.s32.totalorder %s24, 1
      %p173 = por %p171, %p172
      %p175 = scmp.ne.s32.totalorder %s160, %s174
      %p176 = scmp.eq.s32.totalorder %s24, 0
      %p177 = por %p175, %p176
      %s178 = ssub.s32 %s18, %s25
      %p179 = scmp.eq.s32.totalorder %s178, 0
      %s181 = sadd.s32 %s180, 1
      %s182 = scalar_select %p179, %s180, %s181
      %p185 = pneg %p179
      %p186 = scmp.eq.s32.totalorder %s18, 1
      %p187 = por %p185, %p186
      %p188 = scmp.ne.s32.totalorder %s180, %s183
      %p189 = scmp.eq.s32.totalorder %s18, 0
      %p190 = por %p188, %p189
      %p191 = scmp.ne.s32.totalorder %s180, %s183
      %p192 = scmp.eq.s32.totalorder %s23, 1
      %p193 = por %p191, %p192
      %p194 = scmp.ne.s32.totalorder %s183, %s184
      %p195 = scmp.eq.s32.totalorder %s23, 0
      %p196 = por %p194, %p195
      %p197 = scmp.ne.s32.totalorder %s183, %s184
      %p198 = scmp.eq.s32.totalorder %s24, 1
      %p199 = por %p197, %p198
      %p201 = scmp.ne.s32.totalorder %s184, %s200
      %p202 = scmp.eq.s32.totalorder %s24, 0
      %p203 = por %p201, %p202
      %p204 = scmp.le.s32.totalorder 1, %s18
      %p205 = scmp.lt.s32.totalorder %s18, 3
      %p206 = pnand %p204, %p205
      %p207 = pneg %p206
      // Predicated region
      $region9: #{tpu_custom_call.1} parent=5 // pred_check
        _
      $region10: #{tpu_custom_call.1} parent=5 // pred_check_branch
        %209 = sbr.rel (%p206) target = $region12
      $region11: #{tpu_custom_call.1} parent=5 // pred_region
        %s210 = ssub.s32 %s18, 1
        // Predicated region
        $region13: #{tpu_custom_call.1} parent=11 // pred_check
          %p211 = pneg %p65
        $region14: #{tpu_custom_call.1} parent=11 // pred_check_branch
          %213 = sbr.rel (%p211) target = $region16
        $region15: #{tpu_custom_call.1} parent=11 // pred_region
          %s215 = ssub.s32 256, 256
          %216 = vsyncadd [#allocation6], %s215
          %s217 = sshll.u32 [#allocation5], 4
          %s218 = int_to_ptr.vmem [resolvable:$true] %s217
          %223 = dma.hbm_to_vmem [thread:$0]  %s1, 256, %s218, [#allocation6], 128, 128, 8
        $region16: #{tpu_custom_call.1} parent=11 // pred_fallthru
          _
        // Predicated region
        $region17: #{tpu_custom_call.1} parent=11 // pred_check
          %p224 = pneg %p86
        $region18: #{tpu_custom_call.1} parent=11 // pred_check_branch
          %226 = sbr.rel (%p224) target = $region20
        $region19: #{tpu_custom_call.1} parent=11 // pred_region
          _
        $region20: #{tpu_custom_call.1} parent=11 // pred_fallthru
          _
        // Predicated region
        $region21: #{tpu_custom_call.1} parent=11 // pred_check
          %p227 = pneg %p107
        $region22: #{tpu_custom_call.1} parent=11 // pred_check_branch
          %229 = sbr.rel (%p227) target = $region24
        $region23: #{tpu_custom_call.1} parent=11 // pred_region
          %s231 = ssub.s32 2048, 2048
          %232 = vsyncadd [#allocation6], %s231
          %s233 = sshll.u32 [#allocation7], 4
          %s234 = int_to_ptr.vmem [resolvable:$true] %s233
          %239 = dma.hbm_to_vmem [thread:$0]  %s3, 2048, %s234, [#allocation6], 128, 128, 8
        $region24: #{tpu_custom_call.1} parent=11 // pred_fallthru
          _
        // Predicated region
        $region25: #{tpu_custom_call.1} parent=11 // pred_check
          %p240 = pneg %p128
        $region26: #{tpu_custom_call.1} parent=11 // pred_check_branch
          %242 = sbr.rel (%p240) target = $region28
        $region27: #{tpu_custom_call.1} parent=11 // pred_region
          _
        $region28: #{tpu_custom_call.1} parent=11 // pred_fallthru
          _
        // Predicated region
        $region29: #{tpu_custom_call.1} parent=11 // pred_check
          %p243 = pneg %p149
        $region30: #{tpu_custom_call.1} parent=11 // pred_check_branch
          %245 = sbr.rel (%p243) target = $region32
        $region31: #{tpu_custom_call.1} parent=11 // pred_region
          _
        $region32: #{tpu_custom_call.1} parent=11 // pred_fallthru
          _
        // Predicated region
        $region33: #{tpu_custom_call.1} parent=11 // pred_check
          %p246 = pneg %p170
        $region34: #{tpu_custom_call.1} parent=11 // pred_check_branch
          %248 = sbr.rel (%p246) target = $region36
        $region35: #{tpu_custom_call.1} parent=11 // pred_region
          _
        $region36: #{tpu_custom_call.1} parent=11 // pred_fallthru
          _
      $region12: #{tpu_custom_call.1} parent=5 // pred_fallthru
        _
      %p249 = scmp.lt.s32.totalorder %s18, 2
      // Predicated region
      $region37: #{tpu_custom_call.1} parent=5 // pred_check
        %p250 = pneg %p249
      $region38: #{tpu_custom_call.1} parent=5 // pred_check_branch
        %252 = sbr.rel (%p250) target = $region40
      $region39: #{tpu_custom_call.1} parent=5 // pred_region
        // Predicated region
        $region41: #{tpu_custom_call.1} parent=39 // pred_check
          %p253 = pneg %p38
        $region42: #{tpu_custom_call.1} parent=39 // pred_check_branch
          %255 = sbr.rel (%p253) target = $region44
        $region43: #{tpu_custom_call.1} parent=39 // pred_region
          %s256 = sand.u32 %s28, 1
          %s257 = scalar_lea.sflag [#allocation4], %s256
          %s258 = sand.u32 %s28, 1
          %s259 = smul.addr %s258, 8
          %s260 = scalar_lea.vmem [#allocation3], %s259
          %s262 = ssub.s32 128, 128
          %263 = vsyncadd %s257, %s262
          %s264 = smul.addr %s18, 128
          %s265 = scalar_lea.hbm %s0, %s264
          %s267 = sshll.u32 %s260, 4
          %s268 = int_to_ptr.vmem [resolvable:$true] %s267
          %270 = dma.hbm_to_vmem [thread:$0]  %s265, 128, %s268, %s257
        $region44: #{tpu_custom_call.1} parent=39 // pred_fallthru
          _
      $region40: #{tpu_custom_call.1} parent=5 // pred_fallthru
        _
      %p271 = scmp.le.s32.totalorder 1, %s18
      %p272 = scmp.lt.s32.totalorder %s18, 3
      %p273 = pnand %p271, %p272
      %p274 = pneg %p273
      // Predicated region
      $region45: #{tpu_custom_call.1} parent=5 // pred_check
        _
      $region46: #{tpu_custom_call.1} parent=5 // pred_check_branch
        %276 = sbr.rel (%p273) target = $region48
      $region47: #{tpu_custom_call.1} parent=5 // pred_region
        %s277 = ssub.s32 %s18, 1
        %s278 = sand.u32 %s31, 1
        %s279 = scalar_lea.sflag [#allocation4], %s278
        %s280 = sand.u32 %s31, 1
        %s281 = smul.addr %s280, 8
        %s282 = scalar_lea.vmem [#allocation3], %s281
        // Predicated region
        $region49: #{tpu_custom_call.1} parent=47 // pred_check
          %p283 = pneg %p44
        $region50: #{tpu_custom_call.1} parent=47 // pred_check_branch
          %285 = sbr.rel (%p283) target = $region52
        $region51: #{tpu_custom_call.1} parent=47 // pred_region
          %286 = dma.done %s279, 128
        $region52: #{tpu_custom_call.1} parent=47 // pred_fallthru
          _
        // Predicated region
        $region53: #{tpu_custom_call.1} parent=47 // pred_check
          %p287 = pneg %p65
        $region54: #{tpu_custom_call.1} parent=47 // pred_check_branch
          %289 = sbr.rel (%p287) target = $region56
        $region55: #{tpu_custom_call.1} parent=47 // pred_region
          %290 = dma.done [#allocation6], 256
        $region56: #{tpu_custom_call.1} parent=47 // pred_fallthru
          _
        // Predicated region
        $region57: #{tpu_custom_call.1} parent=47 // pred_check
          %p291 = pneg %p107
        $region58: #{tpu_custom_call.1} parent=47 // pred_check_branch
          %293 = sbr.rel (%p291) target = $region60
        $region59: #{tpu_custom_call.1} parent=47 // pred_region
          %294 = dma.done [#allocation6], 2048
        $region60: #{tpu_custom_call.1} parent=47 // pred_fallthru
          _
        %s295 = sand.u32 %s31, 1
        %s296 = scalar_lea.sflag [#allocation4], %s295
        %s297 = sand.u32 %s31, 1
        %s298 = smul.addr %s297, 8
        %s299 = scalar_lea.vmem [#allocation3], %s298
        %p300 = pneg %p44
        %p301 = pneg %p41
        %p302 = pneg %p65
        %p303 = pneg %p62
        %p304 = pneg %p86
        %p305 = pneg %p83
        %p306 = pneg %p107
        %p307 = pneg %p104
        %p308 = pneg %p128
        %p309 = pneg %p125
        %p310 = pneg %p149
        %p311 = pneg %p146
        %p312 = pneg %p170
        %p313 = pneg %p167
        %p314 = pneg %p196
        %p315 = pneg %p193
        %p316 = scmp.lt.s32.totalorder %s23, 1
        %s317 = scalar_select %p316, %s23, 1
        %s318 = smul.addr %s317, 8
        %s319 = scalar_lea.vmem %s7, %s318
        %p320 = scmp.lt.s32.totalorder %s23, 1
        %s321 = scalar_select %p320, %s23, 1
        %s322 = smul.addr %s321, 8
        %s323 = scalar_lea.vmem %s7, %s322
        %v324 = vld [vmem:[%s282] sm:$0xff]
        %v325 = vld [vmem:[#allocation5] sm:$0xff]
        %v326 = vld [vmem:[#allocation5 + $0x8] sm:$0xff]
        %v327 = vld [vmem:[%s2] sm:$0x1]
        %v329 = vlaneseq
        %v330 = vshrl.u32 %v329, 7
        %v331 = vsub.s32 0, %v330
        %v332 = vrot.slane %v327, %v331
        %vm334 = vcmask 130048
        %v336 = vsel %vm334, %v324, 0
        %338 = vmatprep.subr.mxu0 0.0
        %339 = vmatpush1.msra.mxu0 %v325
        %340 = vmatprep.subr.mxu0 0.0
        %341 = vmatpush1.msra.mxu0 %v326
        %342 = vmatprep.subr.mxu0 0.0
        %343 = vmatpush1.msra.mxu0 0.0
        %344 = vmatprep.subr.mxu0 0.0
        %345 = vmatpush1.msra.mxu0 0.0
        %346 = vmatprep.subr.mxu0 0.0
        %347 = vmatpush1.msra.mxu0 0.0
        %348 = vmatprep.subr.mxu0 0.0
        %349 = vmatpush1.msra.mxu0 0.0
        %350 = vmatprep.subr.mxu0 0.0
        %351 = vmatpush1.msra.mxu0 0.0
        %352 = vmatprep.subr.mxu0 0.0
        %353 = vmatpush1.msra.mxu0 0.0
        %354 = vmatprep.subr.mxu0 0.0
        %355 = vmatpush1.msra.mxu0 0.0
        %356 = vmatprep.subr.mxu0 0.0
        %357 = vmatpush1.msra.mxu0 0.0
        %358 = vmatprep.subr.mxu0 0.0
        %359 = vmatpush1.msra.mxu0 0.0
        %360 = vmatprep.subr.mxu0 0.0
        %361 = vmatpush1.msra.mxu0 0.0
        %362 = vmatprep.subr.mxu0 0.0
        %363 = vmatpush1.msra.mxu0 0.0
        %364 = vmatprep.subr.mxu0 0.0
        %365 = vmatpush1.msra.mxu0 0.0
        %366 = vmatprep.subr.mxu0 0.0
        %367 = vmatpush1.msra.mxu0 0.0
        %368 = vmatprep.subr.mxu0 0.0
        %369 = vmatpush1.msra.mxu0 0.0
        %370 = vmatprep.subr.mxu0 0.0
        %371 = vmatpush1.msra.mxu0 0.0
        %372 = vmatprep.subr.mxu0 0.0
        %373 = vmatpush1.msra.mxu0 0.0
        %374 = vmatprep.subr.mxu0 0.0
        %375 = vmatpush1.msra.mxu0 0.0
        %376 = vmatprep.subr.mxu0 0.0
        %377 = vmatpush1.msra.mxu0 0.0
        %378 = vmatprep.subr.mxu0 0.0
        %379 = vmatpush1.msra.mxu0 0.0
        %380 = vmatprep.subr.mxu0 0.0
        %381 = vmatpush1.msra.mxu0 0.0
        %382 = vmatprep.subr.mxu0 0.0
        %383 = vmatpush1.msra.mxu0 0.0
        %384 = vmatprep.subr.mxu0 0.0
        %385 = vmatpush1.msra.mxu0 0.0
        %386 = vmatprep.subr.mxu0 0.0
        %387 = vmatpush1.msra.mxu0 0.0
        %388 = vmatprep.subr.mxu0 0.0
        %389 = vmatpush1.msra.mxu0 0.0
        %390 = vmatprep.subr.mxu0 0.0
        %391 = vmatpush1.msra.mxu0 0.0
        %392 = vmatprep.subr.mxu0 0.0
        %393 = vmatpush1.msra.mxu0 0.0
        %394 = vmatprep.subr.mxu0 0.0
        %395 = vmatpush1.msra.mxu0 0.0
        %396 = vmatprep.subr.mxu0 0.0
        %397 = vmatpush1.msra.mxu0 0.0
        %398 = vmatprep.subr.mxu0 0.0
        %399 = vmatpush1.msra.mxu0 0.0
        %400 = vmatprep.subr.mxu0 0.0
        %401 = vmatpush1.msra.mxu0 0.0
        %402 = vmatprep.mubr.f32.mxu0 0.0
        %403 = vmatmul.mubr.f32.gmra.mrb[0].mxu0 %v336
        %v404 = vpop.f32.mrb[0].mxu0
        %v405 = vadd.f32 %v332, %v404
        %v406 = vpop.f32.mrb[0].mxu0
        %407 = vdwg.mxu0
        %vm408 = vcmp.gt.f32.partialorder %v405, 0.0
        %v409 = vmul.f32 %v405, 0.01
        %v410 = vsel %vm408, %v405, %v409
        %v411 = vld [vmem:[#allocation7] sm:$0xff]
        %v412 = vld [vmem:[#allocation7 + $0x8] sm:$0xff]
        %v413 = vld [vmem:[#allocation7 + $0x10] sm:$0xff]
        %v414 = vld [vmem:[#allocation7 + $0x18] sm:$0xff]
        %v415 = vld [vmem:[#allocation7 + $0x20] sm:$0xff]
        %v416 = vld [vmem:[#allocation7 + $0x28] sm:$0xff]
        %v417 = vld [vmem:[#allocation7 + $0x30] sm:$0xff]
        %v418 = vld [vmem:[#allocation7 + $0x38] sm:$0xff]
        %v419 = vld [vmem:[#allocation7 + $0x40] sm:$0xff]
        %v420 = vld [vmem:[#allocation7 + $0x48] sm:$0xff]
        %v421 = vld [vmem:[#allocation7 + $0x50] sm:$0xff]
        %v422 = vld [vmem:[#allocation7 + $0x58] sm:$0xff]
        %v423 = vld [vmem:[#allocation7 + $0x60] sm:$0xff]
        %v424 = vld [vmem:[#allocation7 + $0x68] sm:$0xff]
        %v425 = vld [vmem:[#allocation7 + $0x70] sm:$0xff]
        %v426 = vld [vmem:[#allocation7 + $0x78] sm:$0xff]
        %v427 = vld [vmem:[%s4] sm:$0x1]
        %v429 = vlaneseq
        %v430 = vshrl.u32 %v429, 7
        %v431 = vsub.s32 0, %v430
        %v432 = vrot.slane %v427, %v431
        %434 = vmatprep.subr.mxu0 0.0
        %435 = vmatpush1.msra.mxu0 %v411
        %436 = vmatprep.subr.mxu0 0.0
        %437 = vmatpush1.msra.mxu0 %v412
        %438 = vmatprep.subr.mxu0 0.0
        %439 = vmatpush1.msra.mxu0 %v413
        %440 = vmatprep.subr.mxu0 0.0
        %441 = vmatpush1.msra.mxu0 %v414
        %442 = vmatprep.subr.mxu0 0.0
        %443 = vmatpush1.msra.mxu0 %v415
        %444 = vmatprep.subr.mxu0 0.0
        %445 = vmatpush1.msra.mxu0 %v416
        %446 = vmatprep.subr.mxu0 0.0
        %447 = vmatpush1.msra.mxu0 %v417
        %448 = vmatprep.subr.mxu0 0.0
        %449 = vmatpush1.msra.mxu0 %v418
        %450 = vmatprep.subr.mxu0 0.0
        %451 = vmatpush1.msra.mxu0 %v419
        %452 = vmatprep.subr.mxu0 0.0
        %453 = vmatpush1.msra.mxu0 %v420
        %454 = vmatprep.subr.mxu0 0.0
        %455 = vmatpush1.msra.mxu0 %v421
        %456 = vmatprep.subr.mxu0 0.0
        %457 = vmatpush1.msra.mxu0 %v422
        %458 = vmatprep.subr.mxu0 0.0
        %459 = vmatpush1.msra.mxu0 %v423
        %460 = vmatprep.subr.mxu0 0.0
        %461 = vmatpush1.msra.mxu0 %v424
        %462 = vmatprep.subr.mxu0 0.0
        %463 = vmatpush1.msra.mxu0 %v425
        %464 = vmatprep.subr.mxu0 0.0
        %465 = vmatpush1.msra.mxu0 %v426
        %466 = vmatprep.subr.mxu0 0.0
        %467 = vmatpush1.msra.mxu0 0.0
        %468 = vmatprep.subr.mxu0 0.0
        %469 = vmatpush1.msra.mxu0 0.0
        %470 = vmatprep.subr.mxu0 0.0
        %471 = vmatpush1.msra.mxu0 0.0
        %472 = vmatprep.subr.mxu0 0.0
        %473 = vmatpush1.msra.mxu0 0.0
        %474 = vmatprep.subr.mxu0 0.0
        %475 = vmatpush1.msra.mxu0 0.0
        %476 = vmatprep.subr.mxu0 0.0
        %477 = vmatpush1.msra.mxu0 0.0
        %478 = vmatprep.subr.mxu0 0.0
        %479 = vmatpush1.msra.mxu0 0.0
        %480 = vmatprep.subr.mxu0 0.0
        %481 = vmatpush1.msra.mxu0 0.0
        %482 = vmatprep.subr.mxu0 0.0
        %483 = vmatpush1.msra.mxu0 0.0
        %484 = vmatprep.subr.mxu0 0.0
        %485 = vmatpush1.msra.mxu0 0.0
        %486 = vmatprep.subr.mxu0 0.0
        %487 = vmatpush1.msra.mxu0 0.0
        %488 = vmatprep.subr.mxu0 0.0
        %489 = vmatpush1.msra.mxu0 0.0
        %490 = vmatprep.subr.mxu0 0.0
        %491 = vmatpush1.msra.mxu0 0.0
        %492 = vmatprep.subr.mxu0 0.0
        %493 = vmatpush1.msra.mxu0 0.0
        %494 = vmatprep.subr.mxu0 0.0
        %495 = vmatpush1.msra.mxu0 0.0
        %496 = vmatprep.subr.mxu0 0.0
        %497 = vmatpush1.msra.mxu0 0.0
        %498 = vmatprep.mubr.f32.mxu0 0.0
        %499 = vmatmul.mubr.f32.gmra.mrb[0].mxu0 %v410
        %v500 = vpop.f32.mrb[0].mxu0
        %v501 = vadd.f32 %v432, %v500
        %v502 = vpop.f32.mrb[0].mxu0
        %503 = vdwg.mxu0
        %vm504 = vcmp.gt.f32.partialorder %v501, 0.0
        %v505 = vmul.f32 %v501, 0.01
        %v506 = vsel %vm504, %v501, %v505
        %v507 = vld [vmem:[%s5] sm:$0x1]
        %v509 = vlaneseq
        %v510 = vshrl.u32 %v509, 7
        %v511 = vsub.s32 0, %v510
        %v512 = vrot.slane %v507, %v511
        %v514 = vmul.f32 %v506, %v512
        %515 = vadd.xlane.f32.xlu0 %v514
        %v516 = vpop.xlane.xlu0 %515
        %s517 = sld [smem:[#allocation2]]
        %v518 = vstv %s517
        %v519 = vadd.f32 %v516, %v518
        %vm520 = vcmask 7168
        %521 = vst.msk [vmem:[%s323] sm:$0xff] %vm520, %v519
        %p522 = scmp.lt.s32.totalorder %s23, 1
        %s523 = scalar_select %p522, %s23, 1
        %s524 = smul.addr %s523, 8
        %s525 = scalar_lea.vmem %s7, %s524
        // Predicated region
        $region61: #{tpu_custom_call.1} parent=47 // pred_check
          %p526 = pneg %p193
        $region62: #{tpu_custom_call.1} parent=47 // pred_check_branch
          %528 = sbr.rel (%p526) target = $region64
        $region63: #{tpu_custom_call.1} parent=47 // pred_region
          _
        $region64: #{tpu_custom_call.1} parent=47 // pred_fallthru
          _
      $region48: #{tpu_custom_call.1} parent=5 // pred_fallthru
        _
      %p529 = scmp.le.s32.totalorder 2, %s18
      // Predicated region
      $region65: #{tpu_custom_call.1} parent=5 // pred_check
        %p530 = pneg %p529
      $region66: #{tpu_custom_call.1} parent=5 // pred_check_branch
        %532 = sbr.rel (%p530) target = $region68
      $region67: #{tpu_custom_call.1} parent=5 // pred_region
        %s533 = ssub.s32 %s18, 2
        // Predicated region
        $region69: #{tpu_custom_call.1} parent=67 // pred_check
          %p534 = pneg %p199
        $region70: #{tpu_custom_call.1} parent=67 // pred_check_branch
          %536 = sbr.rel (%p534) target = $region72
        $region71: #{tpu_custom_call.1} parent=67 // pred_region
          %p537 = scmp.lt.s32.totalorder %s24, 1
          %s538 = scalar_select %p537, %s24, 1
          %s539 = smul.addr %s538, 8
          %s540 = scalar_lea.vmem %s7, %s539
        $region72: #{tpu_custom_call.1} parent=67 // pred_fallthru
          _
      $region68: #{tpu_custom_call.1} parent=5 // pred_fallthru
        _
    $region6: #{tpu_custom_call.1} parent=1 // loop_footer
      %s22 = sadd.s32 1, %s18
    $region7: #{tpu_custom_call.1} parent=1 // loop_footer_branch
      %17 = sbr.rel target = $region3
    $region8: #{tpu_custom_call.1} parent=1 // loop_exit
      _
    %541 = vsyncpa [#allocation4], 1
    %s542 = scalar_lea.sflag [#allocation4], 1
    %543 = vsyncpa %s542, 1
    %544 = vsyncpa [#allocation6], 1

</llo_original>
